<compile_context>
chip_gen: v5e
topology: v5e:2x2
jax: 0.10.0
libtpu: 0.0.40
codegen_flags: <defaults>
</compile_context>

<pallas_src>
import functools

import jax
import jax.numpy as jnp
from jax.experimental import pallas as pl
from jax.experimental.pallas import tpu as pltpu


def get_grid_size_2d(H, W, patch_size, patch_stride=None):
    # Matches the common Segmenter-style helper: with no stride, grid = size // patch.
    if patch_stride is None:
        return H // patch_size, W // patch_size
    return (H - patch_size) // patch_stride + 1, (W - patch_size) // patch_stride + 1


def _round_up(x, m):
    return ((x + m - 1) // m) * m


def _linear_kernel(x_ref, w_ref, b_ref, o_ref):
    # Cast x to the weight compute dtype (bf16) in-kernel: VPU work that hides
    # under the DMA bottleneck, and saves a full HBM read+write pass vs a
    # wrapper-side astype.  Accumulation stays f32 on the MXU.
    x = x_ref[...].astype(w_ref.dtype)
    acc = jnp.dot(x, w_ref[...], preferred_element_type=jnp.float32)
    o_ref[...] = (acc + b_ref[...]).astype(o_ref.dtype)


def linear_head_pallas(x2d, weight, bias, *, tile_m=None,
                       compute_dtype=jnp.bfloat16, out_dtype=None,
                       x_buffer_count=2):
    """x2d: (M, D), weight: (D, C), bias: (C,) or (1, C) -> (M, C).

    out_dtype defaults to x2d.dtype (matches torch semantics).  If the
    downstream consumer takes bf16, pass out_dtype=jnp.bfloat16 to halve the
    padded (M, C_pad) output write on this mem-bound head.
    """
    M, D = x2d.shape
    C = weight.shape[1]
    out_dtype = jnp.dtype(out_dtype or x2d.dtype)
    cdt = jnp.dtype(compute_dtype)

    # Lane-dense output width (unmasked vst, full MXU N tiles).
    C_pad = _round_up(C, 128)

    # Token-axis tile: big tiles amortize the ~0.35 us per-grid-step overhead
    # and sit near the HBM roofline; clamp to the problem size, and make sure
    # there are >= 2 grid steps when possible so dimension_semantics=
    # ("parallel",) actually shards across v7x's two TensorCores.
    if tile_m is None:
        tile_m = 1024
    tile_m = max(128, _round_up(tile_m, 128))
    tile_m = min(tile_m, _round_up(M, 128))
    if M > 128 and pl.cdiv(M, tile_m) < 2:
        tile_m = _round_up(pl.cdiv(M, 2), 128)
    grid = (pl.cdiv(M, tile_m),)   # ragged last block handled by Pallas masking

    # Weight / bias prep: zero-pad C -> C_pad and cast weight to compute dtype.
    # When the caller passes pre-padded / pre-cast tensors (module path) these
    # are no-ops; otherwise they are tiny (D*C_pad) HBM ops.
    wc = weight.astype(cdt)
    bias2d = jnp.asarray(bias, dtype=jnp.float32).reshape(1, -1)
    if C_pad != C:
        wc = jnp.pad(wc, ((0, 0), (0, C_pad - C)))
        bias2d = jnp.pad(bias2d, ((0, 0), (0, C_pad - bias2d.shape[1])))

    # VMEM budget: double-buffered x tile + double-buffered out tile + resident
    # weight/bias, 2x headroom, capped at 48 MiB so v7x (64 MiB physical) keeps
    # room for Mosaic internal scratch and surrounding fusions.
    bytes_x = 2 * tile_m * D * x2d.dtype.itemsize
    bytes_o = 2 * tile_m * C_pad * out_dtype.itemsize
    bytes_w = D * C_pad * cdt.itemsize + 4 * C_pad
    vmem_limit = int(min(48 << 20, max(16 << 20, 2 * (bytes_x + bytes_o + bytes_w))))

    # Default double-buffering; on v7x a 3-deep pipeline on x can hide DMA
    # issue latency (sweep x_buffer_count=3 there).
    x_spec_kwargs = {}
    if x_buffer_count != 2:
        x_spec_kwargs["pipeline_mode"] = pl.Buffered(x_buffer_count)
    x_spec = pl.BlockSpec((tile_m, D), lambda i: (i, 0), **x_spec_kwargs)

    y = pl.pallas_call(
        _linear_kernel,
        out_shape=jax.ShapeDtypeStruct((M, C_pad), out_dtype),
        grid_spec=pltpu.PrefetchScalarGridSpec(
            num_scalar_prefetch=0,
            grid=grid,
            in_specs=[
                x_spec,
                # Constant block index -> Pallas keeps weight/bias resident in
                # VMEM across grid steps (x is the only re-streamed operand).
                pl.BlockSpec((D, C_pad), lambda i: (0, 0)),
                pl.BlockSpec((1, C_pad), lambda i: (0, 0)),
            ],
            out_specs=pl.BlockSpec((tile_m, C_pad), lambda i: (i, 0)),
        ),
        compiler_params=pltpu.CompilerParams(
            dimension_semantics=("parallel",),
            vmem_limit_bytes=vmem_limit,
        ),
    )(x2d, wc, bias2d)

    # Trim padded classes only (no row padding to trim).  Under jit this slice
    # fuses with the caller's reshape/transpose.
    return y if C_pad == C else y[:, :C]


@functools.partial(jax.jit, static_argnums=(3, 4, 5))
def _decoder_forward(x, weight_p, bias_p, GS_H, GS_W, n_cls):
    B, N, D = x.shape
    y = linear_head_pallas(x.reshape(B * N, D), weight_p, bias_p)   # (M, C_pad)
    # Glue: slice padded classes + rearrange 'b (h w) c -> b c h w' (NCHW, per
    # the PyTorch spec).  Kept under this jit so XLA fuses slice+reshape+
    # transpose into one output-sized relayout.
    # TODO(synk): if downstream consumes NHWC, return y[..., :n_cls] reshaped
    # to (B, GS_H, GS_W, n_cls) instead and skip the transpose entirely.
    y = y[:, :n_cls].reshape(B, GS_H, GS_W, n_cls)
    return jnp.transpose(y, (0, 3, 1, 2))


class DecoderLinearPallas:
    """JAX/Pallas port of DecoderLinear. forward(x, im_size) -> (B, n_cls, GS_H, GS_W)."""

    def __init__(self, n_cls, patch_size, d_encoder, patch_stride=None, key=None,
                 compute_dtype=jnp.bfloat16):
        self.n_cls = n_cls
        self.patch_size = patch_size
        self.patch_stride = patch_stride
        self.d_encoder = d_encoder
        if key is None:
            key = jax.random.PRNGKey(0)
        wkey, _ = jax.random.split(key)
        # init_weights: trunc_normal(std=0.02) on Linear weight, zero bias.
        self.weight = (
            0.02 * jax.random.truncated_normal(
                wkey, -2.0, 2.0, (d_encoder, n_cls), dtype=jnp.float32
            )
        )
        self.bias = jnp.zeros((n_cls,), dtype=jnp.float32)
        # Pre-padded / pre-cast parameter copies so the per-call wrapper does
        # zero parameter prep in HBM (zero-padded classes give exact results
        # and are sliced off after the kernel).
        C_pad = _round_up(n_cls, 128)
        self.weight_p = jnp.pad(
            self.weight, ((0, 0), (0, C_pad - n_cls))
        ).astype(compute_dtype)
        self.bias_p = jnp.pad(self.bias, (0, C_pad - n_cls)).reshape(1, C_pad)

    def __call__(self, x, im_size, skip=None):
        H, W = im_size
        GS_H, GS_W = get_grid_size_2d(H, W, self.patch_size, self.patch_stride)
        B, N, D = x.shape
        assert N == GS_H * GS_W and D == self.d_encoder
        return _decoder_forward(x, self.weight_p, self.bias_p, GS_H, GS_W, self.n_cls)


if __name__ == "__main__":
    key = jax.random.PRNGKey(0)
    kx, kp, kr = jax.random.split(key, 3)

    # --- Module-level check (small shapes consistent with the forward) ---
    B = 2
    d_encoder = 32
    n_cls = 8
    patch_size = 4
    im_size = (16, 16)  # -> grid 4x4, N = 16 tokens

    GS_H, GS_W = get_grid_size_2d(im_size[0], im_size[1], patch_size, None)
    N = GS_H * GS_W

    x = jax.random.normal(kx, (B, N, d_encoder), dtype=jnp.float32)

    decoder = DecoderLinearPallas(n_cls, patch_size, d_encoder, key=kp)
    out = jax.block_until_ready(decoder(x, im_size))

    # Reference in plain JAX (same semantics as torch Linear + rearrange).
    # Weights are streamed in bf16 inside the kernel -> ~1e-3-level differences.
    ref = jnp.einsum("bnd,dc->bnc", x, decoder.weight) + decoder.bias
    ref = jnp.transpose(ref.reshape(B, GS_H, GS_W, n_cls), (0, 3, 1, 2))
    assert out.shape == (B, n_cls, GS_H, GS_W)
    assert jnp.allclose(out, ref, atol=2e-2, rtol=2e-2)

    # --- Ragged / multi-step-grid check (M not a multiple of tile_m; partial
    # last block is masked by Pallas, no wrapper-side padding of x) ---
    M2, D2, C2 = 300, 32, 8
    x2 = jax.random.normal(kr, (M2, D2), dtype=jnp.float32)
    w2 = 0.02 * jax.random.normal(kp, (D2, C2), dtype=jnp.float32)
    b2 = jnp.linspace(-0.1, 0.1, C2, dtype=jnp.float32)
    y2 = jax.block_until_ready(linear_head_pallas(x2, w2, b2, tile_m=128))
    ref2 = x2 @ w2 + b2
    assert y2.shape == (M2, C2)
    assert jnp.allclose(y2, ref2, atol=2e-2, rtol=2e-2)

    print("KERNEL_OK")
</pallas_src>

<mosaic_0001>
module attributes {stable_mosaic.version = 11 : i64} {
  func.func @_linear_kernel(%arg0: i32, %arg1: memref<128x32xf32, #tpu.memory_space<vmem>>, %arg2: memref<32x128xbf16, #tpu.memory_space<vmem>>, %arg3: memref<1x128xf32, #tpu.memory_space<vmem>>, %arg4: memref<128x128xf32, #tpu.memory_space<vmem>>) attributes {dimension_semantics = [#tpu.dimension_semantics<parallel>], iteration_bounds = array<i64: 1>, scalar_prefetch = 0 : i64, scratch_operands = 0 : i64, tpu.core_type = #tpu.core_type<tc>, window_params = [{transform_indices = @transform_0, window_bounds = array<i64: 128, 32>}, {pipeline_mode = #tpu.pipeline_mode<synchronous>, transform_indices = @transform_1, window_bounds = array<i64: 32, 128>}, {pipeline_mode = #tpu.pipeline_mode<synchronous>, transform_indices = @transform_2, window_bounds = array<i64: 1, 128>}, {transform_indices = @transform_3, window_bounds = array<i64: 128, 128>}]} {
    %c0 = arith.constant 0 : index
    %c0_0 = arith.constant 0 : index
    %0 = vector.load %arg1[%c0, %c0_0] : memref<128x32xf32, #tpu.memory_space<vmem>>, vector<128x32xf32>
    %1 = arith.truncf %0 : vector<128x32xf32> to vector<128x32xbf16>
    %c0_1 = arith.constant 0 : index
    %c0_2 = arith.constant 0 : index
    %2 = vector.load %arg2[%c0_1, %c0_2] : memref<32x128xbf16, #tpu.memory_space<vmem>>, vector<32x128xbf16>
    %cst = arith.constant dense<0.000000e+00> : vector<128x128xf32>
    %3 = tpu.matmul %1, %2, %cst {dimension_numbers = #tpu.dot_dimension_numbers<[1], [0], [0], [1], [0, 0, 1, 1], [], []>} : vector<128x32xbf16>, vector<32x128xbf16>, vector<128x128xf32> -> vector<128x128xf32>
    %c0_3 = arith.constant 0 : index
    %c0_4 = arith.constant 0 : index
    %4 = vector.load %arg3[%c0_3, %c0_4] : memref<1x128xf32, #tpu.memory_space<vmem>>, vector<1x128xf32>
    %5 = vector.broadcast %4 : vector<1x128xf32> to vector<128x128xf32>
    %6 = arith.addf %3, %5 : vector<128x128xf32>
    %c0_5 = arith.constant 0 : index
    %c0_6 = arith.constant 0 : index
    %7 = vector.load %arg4[%c0_5, %c0_6] : memref<128x128xf32, #tpu.memory_space<vmem>>, vector<128x128xf32>
    tpu.vector_store %arg4[%c0_5, %c0_6], %6 {strides = array<i32>} : memref<128x128xf32, #tpu.memory_space<vmem>>, vector<128x128xf32>,
    return
  }
  func.func @transform_0(%arg0: i32) -> (i32, i32) {
    %c0_i32 = arith.constant 0 : i32
    %c0_i32_0 = arith.constant 0 : i32
    return %arg0, %c0_i32 : i32, i32
  }
  func.func @transform_1(%arg0: i32) -> (i32, i32) {
    %c0_i32 = arith.constant 0 : i32
    %c0_i32_0 = arith.constant 0 : i32
    %c0_i32_1 = arith.constant 0 : i32
    return %c0_i32, %c0_i32_0 : i32, i32
  }
  func.func @transform_2(%arg0: i32) -> (i32, i32) {
    %c0_i32 = arith.constant 0 : i32
    %c0_i32_0 = arith.constant 0 : i32
    %c0_i32_1 = arith.constant 0 : i32
    return %c0_i32, %c0_i32_0 : i32, i32
  }
  func.func @transform_3(%arg0: i32) -> (i32, i32) {
    %c0_i32 = arith.constant 0 : i32
    %c0_i32_0 = arith.constant 0 : i32
    return %arg0, %c0_i32 : i32, i32
  }
}

</mosaic_0001>

<llo_original>
// kernel: _decoder_forward.1
$region0: #{_decoder_forward.1}
  #allocation0 [shape = 'u32[]', space=smem, size = 0x4, offset = 0x4, fixed_abs, tag = 'smem constant byte address 0x4 - core index']
  #allocation1 [shape = 'u32[72,128]{1,0:T(1,128)}', space=vmem, size = 0x9000, scoped, tag = 'internal scratch']
  %s0 = inlined_call_operand.hbm [shape: f32[32,32], index: 0, kind: input, shape index: {}]
  %s1 = inlined_call_operand.hbm [shape: bf16[32,128], index: 1, kind: input, shape index: {}]
  %s2 = inlined_call_operand.vmem [shape: f32[1,128], index: 2, kind: input, shape index: {}]
  %s3 = inlined_call_operand.hbm [shape: f32[32,128], index: 3, kind: output, shape index: {}]
  %s4 = sld [smem:[#allocation0]]
  $region30: #{_decoder_forward.1} parent=0
    _
  %s6 = ssub.s32 1, %s4
  %s7 = scalar_select 0, %s6, %s4
  $region1: #{_decoder_forward.1} parent=0
    #allocation2 [shape = 'u8[65536]{0}', space=vmem, size = 0x10000, scoped, tag = 'input window, operand 0, single buffered']
    #allocation3 [shape = 's32[1]{0}', space=sflag, size = 0x4, scoped, tag = 'scoped memory for _decoder_forward.1']
    #allocation4 [shape = 's32[1]{0}', space=sflag, size = 0x4, scoped, tag = 'scoped memory for _decoder_forward.1']
    #allocation5 [shape = 'u8[8192]{0}', space=vmem, size = 0x2000, scoped, tag = 'input window, operand 1, single buffered']
    #allocation6 [shape = 's32[1]{0}', space=sflag, size = 0x4, scoped, tag = 'scoped memory for _decoder_forward.1']
    #allocation7 [shape = 'u8[65536]{0}', space=vmem, size = 0x10000, scoped, tag = 'output window, operand 0, single buffered']
    %8 = vsyncpa [#allocation3], 0
    %9 = vsyncpa [#allocation6], 0
    %10 = vsyncpa [#allocation4], 0
    // Predicated region
    $region2: #{_decoder_forward.1} parent=1 // pred_check
      _
    $region3: #{_decoder_forward.1} parent=1 // pred_check_branch
      %12 = sbr.rel (0) target = $region5
    $region4: #{_decoder_forward.1} parent=1 // pred_region
      %14 = vsyncadd [#allocation3], 1536
      %s15 = sshll.u32 %s0, 4
      %s16 = int_to_ptr.hbm [resolvable:$true] %s15
      %s17 = sshll.u32 [#allocation2], 4
      %s18 = int_to_ptr.vmem [resolvable:$true] %s17
      %23 = dma.hbm_to_vmem [thread:$0]  %s16, 512, %s18, [#allocation3], 128, 128, 8
    $region5: #{_decoder_forward.1} parent=1 // pred_fallthru
      _
    // Predicated region
    $region6: #{_decoder_forward.1} parent=1 // pred_check
      _
    $region7: #{_decoder_forward.1} parent=1 // pred_check_branch
      %25 = sbr.rel (0) target = $region9
    $region8: #{_decoder_forward.1} parent=1 // pred_region
      %27 = vsyncadd [#allocation6], 0
      %s28 = sshll.u32 %s1, 4
      %s29 = int_to_ptr.hbm [resolvable:$true] %s28
      %s30 = sshll.u32 [#allocation5], 4
      %s31 = int_to_ptr.vmem [resolvable:$true] %s30
      %36 = dma.hbm_to_vmem [thread:$0]  %s29, 256, %s31, [#allocation6], 64, 64, 4
    $region9: #{_decoder_forward.1} parent=1 // pred_fallthru
      _
    // Predicated region
    $region10: #{_decoder_forward.1} parent=1 // pred_check
      _
    $region11: #{_decoder_forward.1} parent=1 // pred_check_branch
      %38 = sbr.rel (0) target = $region13
    $region12: #{_decoder_forward.1} parent=1 // pred_region
      _
    $region13: #{_decoder_forward.1} parent=1 // pred_fallthru
      _
    // Predicated region
    $region14: #{_decoder_forward.1} parent=1 // pred_check
      _
    $region15: #{_decoder_forward.1} parent=1 // pred_check_branch
      %40 = sbr.rel (0) target = $region17
    $region16: #{_decoder_forward.1} parent=1 // pred_region
      %42 = dma.done [#allocation3], 2048
    $region17: #{_decoder_forward.1} parent=1 // pred_fallthru
      _
    // Predicated region
    $region18: #{_decoder_forward.1} parent=1 // pred_check
      _
    $region19: #{_decoder_forward.1} parent=1 // pred_check_branch
      %44 = sbr.rel (0) target = $region21
    $region20: #{_decoder_forward.1} parent=1 // pred_region
      %46 = dma.done [#allocation6], 256
    $region21: #{_decoder_forward.1} parent=1 // pred_fallthru
      _
    %v48 = vld [vmem:[#allocation2] sm:$0xff]
    %v49 = vld [vmem:[#allocation2 + $0x8] sm:$0xff]
    %v50 = vld [vmem:[#allocation2 + $0x10] sm:$0xff]
    %v51 = vld [vmem:[#allocation2 + $0x18] sm:$0xff]
    %v52 = vld [vmem:[#allocation2 + $0x20] sm:$0xff]
    %v53 = vld [vmem:[#allocation2 + $0x28] sm:$0xff]
    %v54 = vld [vmem:[#allocation2 + $0x30] sm:$0xff]
    %v55 = vld [vmem:[#allocation2 + $0x38] sm:$0xff]
    %v56 = vld [vmem:[#allocation2 + $0x40] sm:$0xff]
    %v57 = vld [vmem:[#allocation2 + $0x48] sm:$0xff]
    %v58 = vld [vmem:[#allocation2 + $0x50] sm:$0xff]
    %v59 = vld [vmem:[#allocation2 + $0x58] sm:$0xff]
    %v60 = vld [vmem:[#allocation2 + $0x60] sm:$0xff]
    %v61 = vld [vmem:[#allocation2 + $0x68] sm:$0xff]
    %v62 = vld [vmem:[#allocation2 + $0x70] sm:$0xff]
    %v63 = vld [vmem:[#allocation2 + $0x78] sm:$0xff]
    %v64 = vpack.c.bf16 %v49, %v48
    %v65 = vpack.c.bf16 %v51, %v50
    %v66 = vpack.c.bf16 %v53, %v52
    %v67 = vpack.c.bf16 %v55, %v54
    %v68 = vpack.c.bf16 %v57, %v56
    %v69 = vpack.c.bf16 %v59, %v58
    %v70 = vpack.c.bf16 %v61, %v60
    %v71 = vpack.c.bf16 %v63, %v62
    %v72 = vld [vmem:[#allocation5] sm:$0xf]
    %v73 = vld [vmem:[#allocation5 + $0x4] sm:$0xf]
    %v74 = vld [vmem:[#allocation5 + $0x8] sm:$0xf]
    %v75 = vld [vmem:[#allocation5 + $0xc] sm:$0xf]
    %v76 = vld [vmem:[%s2] sm:$0x1]
    %v78 = vperm.slane %v76, 0
    %v84 = vunpack.c.l.b16 %v72
    %v85 = vunpack.c.l.b16 %v73
    %v86 = vunpack.c.l.b16 %v74
    %v87 = vunpack.c.l.b16 %v75
    %v88 = vpack.c.b16 %v85, %v84
    %v89 = vpack.c.b16 %v87, %v86
    %vm92 = vcmask 261120
    %v94 = vsel %vm92, %v64, 0
    %v97 = vsel %vm92, %v65, 0
    %v100 = vsel %vm92, %v66, 0
    %v103 = vsel %vm92, %v67, 0
    %v106 = vsel %vm92, %v68, 0
    %v109 = vsel %vm92, %v69, 0
    %v112 = vsel %vm92, %v70, 0
    %v115 = vsel %vm92, %v71, 0
    %117 = vmatpush.bf16.msra.mxu0 0
    %118 = vmatpush.bf16.msra.mxu0 0
    %119 = vmatpush.bf16.msra.mxu0 0
    %120 = vmatpush.bf16.msra.mxu0 0
    %121 = vmatpush.bf16.msra.mxu0 0
    %122 = vmatpush.bf16.msra.mxu0 0
    %123 = vmatpush.bf16.msra.mxu0 %v89
    %124 = vmatpush.bf16.msra.mxu0 %v88
    %125 = vmatmul.bf16.gmra.mxu0 %v94
    %v126 = vpop.f32.mrf.mxu0
    %v127 = vadd.f32 %v78, %v126
    %v128 = vpop.f32.mrf.mxu0
    %v129 = vadd.f32 %v78, %v128
    %130 = vmatmul.bf16.gmra.mxu0 %v97
    %v131 = vpop.f32.mrf.mxu0
    %v132 = vadd.f32 %v78, %v131
    %v133 = vpop.f32.mrf.mxu0
    %v134 = vadd.f32 %v78, %v133
    %135 = vmatmul.bf16.gmra.mxu0 %v100
    %v136 = vpop.f32.mrf.mxu0
    %v137 = vadd.f32 %v78, %v136
    %v138 = vpop.f32.mrf.mxu0
    %v139 = vadd.f32 %v78, %v138
    %140 = vmatmul.bf16.gmra.mxu0 %v103
    %v141 = vpop.f32.mrf.mxu0
    %v142 = vadd.f32 %v78, %v141
    %v143 = vpop.f32.mrf.mxu0
    %v144 = vadd.f32 %v78, %v143
    %145 = vmatmul.bf16.gmra.mxu0 %v106
    %v146 = vpop.f32.mrf.mxu0
    %v147 = vadd.f32 %v78, %v146
    %v148 = vpop.f32.mrf.mxu0
    %v149 = vadd.f32 %v78, %v148
    %150 = vmatmul.bf16.gmra.mxu0 %v109
    %v151 = vpop.f32.mrf.mxu0
    %v152 = vadd.f32 %v78, %v151
    %v153 = vpop.f32.mrf.mxu0
    %v154 = vadd.f32 %v78, %v153
    %155 = vmatmul.bf16.gmra.mxu0 %v112
    %v156 = vpop.f32.mrf.mxu0
    %v157 = vadd.f32 %v78, %v156
    %v158 = vpop.f32.mrf.mxu0
    %v159 = vadd.f32 %v78, %v158
    %160 = vmatmul.bf16.gmra.mxu0 %v115
    %v161 = vpop.f32.mrf.mxu0
    %v162 = vadd.f32 %v78, %v161
    %v163 = vpop.f32.mrf.mxu0
    %v164 = vadd.f32 %v78, %v163
    %165 = vdwg.mxu0
    %166 = vst [vmem:[#allocation7] sm:$0xff] %v127
    %167 = vst [vmem:[#allocation7 + $0x8] sm:$0xff] %v129
    %168 = vst [vmem:[#allocation7 + $0x10] sm:$0xff] %v132
    %169 = vst [vmem:[#allocation7 + $0x18] sm:$0xff] %v134
    %170 = vst [vmem:[#allocation7 + $0x20] sm:$0xff] %v137
    %171 = vst [vmem:[#allocation7 + $0x28] sm:$0xff] %v139
    %172 = vst [vmem:[#allocation7 + $0x30] sm:$0xff] %v142
    %173 = vst [vmem:[#allocation7 + $0x38] sm:$0xff] %v144
    %174 = vst [vmem:[#allocation7 + $0x40] sm:$0xff] %v147
    %175 = vst [vmem:[#allocation7 + $0x48] sm:$0xff] %v149
    %176 = vst [vmem:[#allocation7 + $0x50] sm:$0xff] %v152
    %177 = vst [vmem:[#allocation7 + $0x58] sm:$0xff] %v154
    %178 = vst [vmem:[#allocation7 + $0x60] sm:$0xff] %v157
    %179 = vst [vmem:[#allocation7 + $0x68] sm:$0xff] %v159
    %180 = vst [vmem:[#allocation7 + $0x70] sm:$0xff] %v162
    %181 = vst [vmem:[#allocation7 + $0x78] sm:$0xff] %v164
    // Predicated region
    $region22: #{_decoder_forward.1} parent=1 // pred_check
      _
    $region23: #{_decoder_forward.1} parent=1 // pred_check_branch
      %183 = sbr.rel (0) target = $region25
    $region24: #{_decoder_forward.1} parent=1 // pred_region
      %185 = vsyncadd [#allocation4], 1536
      %s186 = sshll.u32 [#allocation7], 4
      %s187 = int_to_ptr.vmem [resolvable:$true] %s186
      %s188 = sshll.u32 %s3, 4
      %s189 = int_to_ptr.hbm [resolvable:$true] %s188
      %194 = dma.vmem_to_hbm [thread:$0]  %s187, 512, %s189, [#allocation4], 128, 128, 8
    $region25: #{_decoder_forward.1} parent=1 // pred_fallthru
      _
    // Predicated region
    $region26: #{_decoder_forward.1} parent=1 // pred_check
      _
    $region27: #{_decoder_forward.1} parent=1 // pred_check_branch
      %196 = sbr.rel (0) target = $region29
    $region28: #{_decoder_forward.1} parent=1 // pred_region
      %198 = dma.done [#allocation4], 2048
    $region29: #{_decoder_forward.1} parent=1 // pred_fallthru
      _
    %199 = vsyncpa [#allocation3], 1
    %200 = vsyncpa [#allocation6], 1
    %201 = vsyncpa [#allocation4], 1

</llo_original>
